<compile_context>
chip_gen: v5e
topology: v5e:2x2
jax: 0.10.0
libtpu: 0.0.40
codegen_flags: <defaults>
</compile_context>

<pallas_src>
import jax
import jax.numpy as jnp
from jax.experimental import pallas as pl
from jax.experimental.pallas import tpu as pltpu


def _pick_batch_block(n, cap=8):
    """Largest divisor of n that is <= cap (images folded into one grid step)."""
    nb = min(n, cap)
    while n % nb:
        nb -= 1
    return nb


def _block_toeplitz_weights(w_hwio, W):
    """(3, 3, Cin, Cout) conv weights -> (3, (W+2)*Cin, W*Cout) banded matrices.

    T[dy, (x+dx)*Cin + c, x*Cout + o] = w[dy, dx, c, o]  (zeros elsewhere), so a
    3x3 / stride-1 / pad-1 conv of a row-flattened image reduces to
        out_row(y)[x*Cout + o] = sum_dy  pad_row(y+dy) @ T[dy]
    The redundant zero MACs are free (the MXU is <1% utilized at these sizes).
    """
    kH, kW, cin, cout = w_hwio.shape
    w_rows = w_hwio.reshape(kH, kW * cin, cout)          # row index = dx*Cin + c
    T = jnp.zeros((kH, (W + 2) * cin, W * cout), w_hwio.dtype)
    for x in range(W):                                   # disjoint column bands
        T = T.at[:, x * cin:(x + kW) * cin, x * cout:(x + 1) * cout].set(w_rows)
    return T


def _conv3x3_rows(act_pad, t_ref, b_ref, H):
    """One 3x3 'same' conv as three row matmuls against block-Toeplitz weights.

    act_pad: (nb, H+2, (W+2)*Cin) zero-halo, already-rectified activations.
    t_ref  : (3, (W+2)*Cin, W*Cout) weights.   b_ref: (1, W*Cout) tiled bias.
    returns: (nb*H, W*Cout) float32.
    """
    nb, _, kw = act_pad.shape
    acc = None
    for dy in range(3):                                  # static unroll, 3 dots
        a = act_pad[:, dy:dy + H, :].reshape(nb * H, kw).astype(t_ref.dtype)
        d = jnp.dot(a, t_ref[dy], preferred_element_type=jnp.float32)
        acc = d if acc is None else acc + d
    return acc + b_ref[...]                              # bias added once


def _make_resblock_kernel(H, W, cin, cout):
    wc_in, wc_out = W * cin, W * cout

    def kernel(x_ref, t1_ref, b1_ref, t2_ref, b2_ref, o_ref, pad_ref):
        # x_ref  : (nb, H+2, (W+2)*cin)   pre-padded input, W & C folded in lanes
        # t*_ref : (3, (W+2)*Cin, W*Cout) block-Toeplitz conv weights
        # b*_ref : (1, W*Cout)            bias tiled across W
        # o_ref  : (nb, H, W*Cout)        lane-dense output block
        # pad_ref: (nb, H+2, (W+2)*cout)  f32 scratch for conv1's activation
        nb = x_ref.shape[0]

        # ---- conv1(relu(x)): relu once; halo stays zero because relu(0) == 0.
        xr = jnp.maximum(x_ref[...].astype(jnp.float32), 0.0)
        r1 = _conv3x3_rows(xr, t1_ref, b1_ref, H)        # (nb*H, W*cout) f32

        # ---- stage relu(r1) in the zero-halo scratch.  Only the 1-pixel halo
        # is cleared (4 thin stores); the interior is fully overwritten.
        zrow = jnp.zeros((nb, 1, (W + 2) * cout), jnp.float32)
        zcol = jnp.zeros((nb, H + 2, cout), jnp.float32)
        pad_ref[:, 0:1, :] = zrow
        pad_ref[:, H + 1:H + 2, :] = zrow
        pad_ref[:, :, 0:cout] = zcol
        pad_ref[:, :, (W + 1) * cout:(W + 2) * cout] = zcol
        pad_ref[:, 1:H + 1, cout:(W + 1) * cout] = (
            jnp.maximum(r1, 0.0).reshape(nb, H, wc_out))

        # ---- conv2(relu(r1))
        r2 = _conv3x3_rows(pad_ref[...], t2_ref, b2_ref, H)

        # ---- identity skip (downsample is None for indim==outdim, stride==1);
        # re-read x's interior from the resident block instead of keeping it
        # live across both convs.
        x_in = x_ref[:, 1:H + 1, cin:(W + 1) * cin].astype(jnp.float32)
        o_ref[...] = (x_in + r2.reshape(nb, H, wc_out)).astype(o_ref.dtype)

    return kernel


# TODO(synk): the downsample / stride>1 / outdim!=indim branch is not
#             implemented; the default ResBlock(indim) config has downsample=None.
def resblock_forward(x_nhwc, w1_hwio, b1, w2_hwio, b2, *,
                     batch_block=None, use_bf16_mxu=False):
    """ResBlock forward.  x_nhwc: (N, H, W, C);  w*_hwio: (3, 3, Cin, Cout)."""
    N, H, W, C = x_nhwc.shape
    cout = w1_hwio.shape[3]
    if cout != C:
        raise NotImplementedError("identity skip requires outdim == indim")

    nb = batch_block if batch_block is not None else _pick_batch_block(N)
    assert N % nb == 0, (N, nb)

    # ---- wrapper-side layout plumbing --------------------------------------
    # pre-pad (conv1 then needs no in-kernel zero+copy) and fold W, C into lanes
    x_pad = jnp.pad(x_nhwc, ((0, 0), (1, 1), (1, 1), (0, 0)))
    x_flat = x_pad.reshape(N, H + 2, (W + 2) * C)

    w_dtype = jnp.bfloat16 if use_bf16_mxu else w1_hwio.dtype
    t1 = _block_toeplitz_weights(w1_hwio, W).astype(w_dtype)
    t2 = _block_toeplitz_weights(w2_hwio, W).astype(w_dtype)
    b1f = jnp.tile(b1.reshape(-1).astype(jnp.float32), W).reshape(1, W * cout)
    b2f = jnp.tile(b2.reshape(-1).astype(jnp.float32), W).reshape(1, W * cout)

    kernel = _make_resblock_kernel(H, W, C, cout)
    out_flat = pl.pallas_call(
        kernel,
        out_shape=jax.ShapeDtypeStruct((N, H, W * cout), x_nhwc.dtype),
        grid_spec=pltpu.PrefetchScalarGridSpec(
            num_scalar_prefetch=0,
            grid=(N // nb,),
            in_specs=[
                pl.BlockSpec((nb, H + 2, (W + 2) * C), lambda n: (n, 0, 0)),
                pl.BlockSpec((3, (W + 2) * C, W * cout), lambda n: (0, 0, 0)),
                pl.BlockSpec((1, W * cout), lambda n: (0, 0)),
                pl.BlockSpec((3, (W + 2) * cout, W * cout), lambda n: (0, 0, 0)),
                pl.BlockSpec((1, W * cout), lambda n: (0, 0)),
            ],
            out_specs=pl.BlockSpec((nb, H, W * cout), lambda n: (n, 0, 0)),
            scratch_shapes=[
                pltpu.VMEM((nb, H + 2, (W + 2) * cout), jnp.float32)],
        ),
        compiler_params=pltpu.CompilerParams(
            dimension_semantics=("parallel",),
            # explicit scoped-VMEM budget: ample for these blocks and safely
            # below v7x's 64 MiB physical VMEM (v5e/v6e have 128 MiB).
            vmem_limit_bytes=48 * 1024 * 1024,
        ),
    )(x_flat, t1, b1f, t2, b2f)

    # TODO(synk): for large images add an H-stripe grid axis (1-row halo) so the
    # resident block set stays inside v7x's 64 MiB VMEM and each core gets
    # enough grid steps to overlap DMA with compute.
    return out_flat.reshape(N, H, W, cout)


def resblock_ref(x_nhwc, w1, b1, w2, b2):
    """Pure-JAX reference (same semantics as the PyTorch module)."""
    def conv(x, w, b):
        y = jax.lax.conv_general_dilated(
            x, w, window_strides=(1, 1), padding="SAME",
            dimension_numbers=("NHWC", "HWIO", "NHWC"))
        return y + b.reshape(1, 1, 1, -1)
    r = conv(jax.nn.relu(x_nhwc), w1, b1)
    r = conv(jax.nn.relu(r), w2, b2)
    return x_nhwc + r


if __name__ == "__main__":
    key = jax.random.PRNGKey(0)
    N, C, H, W = 2, 4, 16, 16                       # ResBlock(indim=4), NCHW input
    k1, k2, k3, k4, k5 = jax.random.split(key, 5)

    x_nchw = jax.random.normal(k1, (N, C, H, W), jnp.float32)    # torch layout
    fan_in = C * 3 * 3
    w1 = jax.random.normal(k2, (3, 3, C, C), jnp.float32) / jnp.sqrt(fan_in)
    b1 = jax.random.normal(k3, (C,), jnp.float32) * 0.1
    w2 = jax.random.normal(k4, (3, 3, C, C), jnp.float32) / jnp.sqrt(fan_in)
    b2 = jax.random.normal(k5, (C,), jnp.float32) * 0.1

    x_nhwc = jnp.transpose(x_nchw, (0, 2, 3, 1))                 # NCHW -> NHWC

    out = resblock_forward(x_nhwc, w1, b1, w2, b2)
    out = jax.block_until_ready(out)

    ref = resblock_ref(x_nhwc, w1, b1, w2, b2)
    max_err = float(jnp.max(jnp.abs(out - ref)))
    assert jnp.allclose(out, ref, atol=1e-4, rtol=1e-4), f"max_err={max_err}"

    print("KERNEL_OK")
</pallas_src>

<mosaic_0001>
module attributes {stable_mosaic.version = 11 : i64} {
  func.func @kernel(%arg0: i32, %arg1: memref<2x18x72xf32, #tpu.memory_space<vmem>>, %arg2: memref<3x72x64xf32, #tpu.memory_space<vmem>>, %arg3: memref<1x64xf32, #tpu.memory_space<vmem>>, %arg4: memref<3x72x64xf32, #tpu.memory_space<vmem>>, %arg5: memref<1x64xf32, #tpu.memory_space<vmem>>, %arg6: memref<2x16x64xf32, #tpu.memory_space<vmem>>, %arg7: memref<2x18x72xf32, #tpu.memory_space<vmem>>) attributes {dimension_semantics = [#tpu.dimension_semantics<parallel>], iteration_bounds = array<i64: 1>, scalar_prefetch = 0 : i64, scratch_operands = 1 : i64, tpu.core_type = #tpu.core_type<tc>, window_params = [{transform_indices = @transform_0, window_bounds = array<i64: 2, 18, 72>}, {pipeline_mode = #tpu.pipeline_mode<synchronous>, transform_indices = @transform_1, window_bounds = array<i64: 3, 72, 64>}, {pipeline_mode = #tpu.pipeline_mode<synchronous>, transform_indices = @transform_2, window_bounds = array<i64: 1, 64>}, {pipeline_mode = #tpu.pipeline_mode<synchronous>, transform_indices = @transform_3, window_bounds = array<i64: 3, 72, 64>}, {pipeline_mode = #tpu.pipeline_mode<synchronous>, transform_indices = @transform_4, window_bounds = array<i64: 1, 64>}, {transform_indices = @transform_5, window_bounds = array<i64: 2, 16, 64>}]} {
    %c0 = arith.constant 0 : index
    %c0_0 = arith.constant 0 : index
    %c0_1 = arith.constant 0 : index
    %0 = vector.load %arg1[%c0, %c0_0, %c0_1] : memref<2x18x72xf32, #tpu.memory_space<vmem>>, vector<2x18x72xf32>
    %cst = arith.constant 0.000000e+00 : f32
    %1 = vector.broadcast %cst : f32 to vector<2x18x72xf32>
    %2 = arith.maximumf %0, %1 : vector<2x18x72xf32>
    %3 = vector.extract_strided_slice %2 {offsets = [0, 0, 0], sizes = [2, 16, 72], strides = [1, 1, 1]} : vector<2x18x72xf32> to vector<2x16x72xf32>
    %4 = vector.shape_cast %3 : vector<2x16x72xf32> to vector<32x72xf32>
    %c0_2 = arith.constant 0 : index
    %c0_3 = arith.constant 0 : index
    %c0_4 = arith.constant 0 : index
    %5 = vector.load %arg2[%c0_2, %c0_3, %c0_4] : memref<3x72x64xf32, #tpu.memory_space<vmem>>, vector<1x72x64xf32>
    %6 = vector.shape_cast %5 : vector<1x72x64xf32> to vector<72x64xf32>
    %cst_5 = arith.constant dense<0.000000e+00> : vector<32x64xf32>
    %7 = tpu.matmul %4, %6, %cst_5 {dimension_numbers = #tpu.dot_dimension_numbers<[1], [0], [0], [1], [0, 0, 1, 1], [], []>} : vector<32x72xf32>, vector<72x64xf32>, vector<32x64xf32> -> vector<32x64xf32>
    %8 = vector.extract_strided_slice %2 {offsets = [0, 1, 0], sizes = [2, 16, 72], strides = [1, 1, 1]} : vector<2x18x72xf32> to vector<2x16x72xf32>
    %9 = vector.shape_cast %8 : vector<2x16x72xf32> to vector<32x72xf32>
    %c1 = arith.constant 1 : index
    %c0_6 = arith.constant 0 : index
    %c0_7 = arith.constant 0 : index
    %10 = vector.load %arg2[%c1, %c0_6, %c0_7] : memref<3x72x64xf32, #tpu.memory_space<vmem>>, vector<1x72x64xf32>
    %11 = vector.shape_cast %10 : vector<1x72x64xf32> to vector<72x64xf32>
    %cst_8 = arith.constant dense<0.000000e+00> : vector<32x64xf32>
    %12 = tpu.matmul %9, %11, %cst_8 {dimension_numbers = #tpu.dot_dimension_numbers<[1], [0], [0], [1], [0, 0, 1, 1], [], []>} : vector<32x72xf32>, vector<72x64xf32>, vector<32x64xf32> -> vector<32x64xf32>
    %13 = arith.addf %7, %12 : vector<32x64xf32>
    %14 = vector.extract_strided_slice %2 {offsets = [0, 2, 0], sizes = [2, 16, 72], strides = [1, 1, 1]} : vector<2x18x72xf32> to vector<2x16x72xf32>
    %15 = vector.shape_cast %14 : vector<2x16x72xf32> to vector<32x72xf32>
    %c2 = arith.constant 2 : index
    %c0_9 = arith.constant 0 : index
    %c0_10 = arith.constant 0 : index
    %16 = vector.load %arg2[%c2, %c0_9, %c0_10] : memref<3x72x64xf32, #tpu.memory_space<vmem>>, vector<1x72x64xf32>
    %17 = vector.shape_cast %16 : vector<1x72x64xf32> to vector<72x64xf32>
    %cst_11 = arith.constant dense<0.000000e+00> : vector<32x64xf32>
    %18 = tpu.matmul %15, %17, %cst_11 {dimension_numbers = #tpu.dot_dimension_numbers<[1], [0], [0], [1], [0, 0, 1, 1], [], []>} : vector<32x72xf32>, vector<72x64xf32>, vector<32x64xf32> -> vector<32x64xf32>
    %19 = arith.addf %13, %18 : vector<32x64xf32>
    %c0_12 = arith.constant 0 : index
    %c0_13 = arith.constant 0 : index
    %20 = vector.load %arg3[%c0_12, %c0_13] : memref<1x64xf32, #tpu.memory_space<vmem>>, vector<1x64xf32>
    %21 = vector.broadcast %20 : vector<1x64xf32> to vector<32x64xf32>
    %22 = arith.addf %19, %21 : vector<32x64xf32>
    %cst_14 = arith.constant 0.000000e+00 : f32
    %23 = vector.broadcast %cst_14 : f32 to vector<2x1x72xf32>
    %cst_15 = arith.constant 0.000000e+00 : f32
    %24 = vector.broadcast %cst_15 : f32 to vector<2x18x4xf32>
    %c0_16 = arith.constant 0 : index
    %c0_17 = arith.constant 0 : index
    %c0_18 = arith.constant 0 : index
    %25 = vector.load %arg7[%c0_16, %c0_17, %c0_18] : memref<2x18x72xf32, #tpu.memory_space<vmem>>, vector<2x1x72xf32>
    tpu.vector_store %arg7[%c0_16, %c0_17, %c0_18], %23 {strides = array<i32>} : memref<2x18x72xf32, #tpu.memory_space<vmem>>, vector<2x1x72xf32>,
    %c0_19 = arith.constant 0 : index
    %c17 = arith.constant 17 : index
    %c0_20 = arith.constant 0 : index
    %26 = vector.load %arg7[%c0_19, %c17, %c0_20] : memref<2x18x72xf32, #tpu.memory_space<vmem>>, vector<2x1x72xf32>
    tpu.vector_store %arg7[%c0_19, %c17, %c0_20], %23 {strides = array<i32>} : memref<2x18x72xf32, #tpu.memory_space<vmem>>, vector<2x1x72xf32>,
    %c0_21 = arith.constant 0 : index
    %c0_22 = arith.constant 0 : index
    %c0_23 = arith.constant 0 : index
    %27 = vector.load %arg7[%c0_21, %c0_22, %c0_23] : memref<2x18x72xf32, #tpu.memory_space<vmem>>, vector<2x18x4xf32>
    tpu.vector_store %arg7[%c0_21, %c0_22, %c0_23], %24 {strides = array<i32>} : memref<2x18x72xf32, #tpu.memory_space<vmem>>, vector<2x18x4xf32>,
    %c0_24 = arith.constant 0 : index
    %c0_25 = arith.constant 0 : index
    %c68 = arith.constant 68 : index
    %28 = vector.load %arg7[%c0_24, %c0_25, %c68] : memref<2x18x72xf32, #tpu.memory_space<vmem>>, vector<2x18x4xf32>
    tpu.vector_store %arg7[%c0_24, %c0_25, %c68], %24 {strides = array<i32>} : memref<2x18x72xf32, #tpu.memory_space<vmem>>, vector<2x18x4xf32>,
    %cst_26 = arith.constant 0.000000e+00 : f32
    %29 = vector.broadcast %cst_26 : f32 to vector<32x64xf32>
    %30 = arith.maximumf %22, %29 : vector<32x64xf32>
    %31 = vector.shape_cast %30 : vector<32x64xf32> to vector<2x16x64xf32>
    %c0_27 = arith.constant 0 : index
    %c1_28 = arith.constant 1 : index
    %c4 = arith.constant 4 : index
    %32 = vector.load %arg7[%c0_27, %c1_28, %c4] : memref<2x18x72xf32, #tpu.memory_space<vmem>>, vector<2x16x64xf32>
    tpu.vector_store %arg7[%c0_27, %c1_28, %c4], %31 {strides = array<i32>} : memref<2x18x72xf32, #tpu.memory_space<vmem>>, vector<2x16x64xf32>,
    %c0_29 = arith.constant 0 : index
    %c0_30 = arith.constant 0 : index
    %c0_31 = arith.constant 0 : index
    %33 = vector.load %arg7[%c0_29, %c0_30, %c0_31] : memref<2x18x72xf32, #tpu.memory_space<vmem>>, vector<2x18x72xf32>
    %34 = vector.extract_strided_slice %33 {offsets = [0, 0, 0], sizes = [2, 16, 72], strides = [1, 1, 1]} : vector<2x18x72xf32> to vector<2x16x72xf32>
    %35 = vector.shape_cast %34 : vector<2x16x72xf32> to vector<32x72xf32>
    %c0_32 = arith.constant 0 : index
    %c0_33 = arith.constant 0 : index
    %c0_34 = arith.constant 0 : index
    %36 = vector.load %arg4[%c0_32, %c0_33, %c0_34] : memref<3x72x64xf32, #tpu.memory_space<vmem>>, vector<1x72x64xf32>
    %37 = vector.shape_cast %36 : vector<1x72x64xf32> to vector<72x64xf32>
    %cst_35 = arith.constant dense<0.000000e+00> : vector<32x64xf32>
    %38 = tpu.matmul %35, %37, %cst_35 {dimension_numbers = #tpu.dot_dimension_numbers<[1], [0], [0], [1], [0, 0, 1, 1], [], []>} : vector<32x72xf32>, vector<72x64xf32>, vector<32x64xf32> -> vector<32x64xf32>
    %39 = vector.extract_strided_slice %33 {offsets = [0, 1, 0], sizes = [2, 16, 72], strides = [1, 1, 1]} : vector<2x18x72xf32> to vector<2x16x72xf32>
    %40 = vector.shape_cast %39 : vector<2x16x72xf32> to vector<32x72xf32>
    %c1_36 = arith.constant 1 : index
    %c0_37 = arith.constant 0 : index
    %c0_38 = arith.constant 0 : index
    %41 = vector.load %arg4[%c1_36, %c0_37, %c0_38] : memref<3x72x64xf32, #tpu.memory_space<vmem>>, vector<1x72x64xf32>
    %42 = vector.shape_cast %41 : vector<1x72x64xf32> to vector<72x64xf32>
    %cst_39 = arith.constant dense<0.000000e+00> : vector<32x64xf32>
    %43 = tpu.matmul %40, %42, %cst_39 {dimension_numbers = #tpu.dot_dimension_numbers<[1], [0], [0], [1], [0, 0, 1, 1], [], []>} : vector<32x72xf32>, vector<72x64xf32>, vector<32x64xf32> -> vector<32x64xf32>
    %44 = arith.addf %38, %43 : vector<32x64xf32>
    %45 = vector.extract_strided_slice %33 {offsets = [0, 2, 0], sizes = [2, 16, 72], strides = [1, 1, 1]} : vector<2x18x72xf32> to vector<2x16x72xf32>
    %46 = vector.shape_cast %45 : vector<2x16x72xf32> to vector<32x72xf32>
    %c2_40 = arith.constant 2 : index
    %c0_41 = arith.constant 0 : index
    %c0_42 = arith.constant 0 : index
    %47 = vector.load %arg4[%c2_40, %c0_41, %c0_42] : memref<3x72x64xf32, #tpu.memory_space<vmem>>, vector<1x72x64xf32>
    %48 = vector.shape_cast %47 : vector<1x72x64xf32> to vector<72x64xf32>
    %cst_43 = arith.constant dense<0.000000e+00> : vector<32x64xf32>
    %49 = tpu.matmul %46, %48, %cst_43 {dimension_numbers = #tpu.dot_dimension_numbers<[1], [0], [0], [1], [0, 0, 1, 1], [], []>} : vector<32x72xf32>, vector<72x64xf32>, vector<32x64xf32> -> vector<32x64xf32>
    %50 = arith.addf %44, %49 : vector<32x64xf32>
    %c0_44 = arith.constant 0 : index
    %c0_45 = arith.constant 0 : index
    %51 = vector.load %arg5[%c0_44, %c0_45] : memref<1x64xf32, #tpu.memory_space<vmem>>, vector<1x64xf32>
    %52 = vector.broadcast %51 : vector<1x64xf32> to vector<32x64xf32>
    %53 = arith.addf %50, %52 : vector<32x64xf32>
    %c0_46 = arith.constant 0 : index
    %c1_47 = arith.constant 1 : index
    %c4_48 = arith.constant 4 : index
    %54 = vector.load %arg1[%c0_46, %c1_47, %c4_48] : memref<2x18x72xf32, #tpu.memory_space<vmem>>, vector<2x16x64xf32>
    %55 = vector.shape_cast %53 : vector<32x64xf32> to vector<2x16x64xf32>
    %56 = arith.addf %54, %55 : vector<2x16x64xf32>
    %c0_49 = arith.constant 0 : index
    %c0_50 = arith.constant 0 : index
    %c0_51 = arith.constant 0 : index
    %57 = vector.load %arg6[%c0_49, %c0_50, %c0_51] : memref<2x16x64xf32, #tpu.memory_space<vmem>>, vector<2x16x64xf32>
    tpu.vector_store %arg6[%c0_49, %c0_50, %c0_51], %56 {strides = array<i32>} : memref<2x16x64xf32, #tpu.memory_space<vmem>>, vector<2x16x64xf32>,
    return
  }
  func.func @transform_0(%arg0: i32) -> (i32, i32, i32) {
    %c0_i32 = arith.constant 0 : i32
    %c0_i32_0 = arith.constant 0 : i32
    %c0_i32_1 = arith.constant 0 : i32
    return %arg0, %c0_i32, %c0_i32_0 : i32, i32, i32
  }
  func.func @transform_1(%arg0: i32) -> (i32, i32, i32) {
    %c0_i32 = arith.constant 0 : i32
    %c0_i32_0 = arith.constant 0 : i32
    %c0_i32_1 = arith.constant 0 : i32
    %c0_i32_2 = arith.constant 0 : i32
    return %c0_i32, %c0_i32_0, %c0_i32_1 : i32, i32, i32
  }
  func.func @transform_2(%arg0: i32) -> (i32, i32) {
    %c0_i32 = arith.constant 0 : i32
    %c0_i32_0 = arith.constant 0 : i32
    %c0_i32_1 = arith.constant 0 : i32
    return %c0_i32, %c0_i32_0 : i32, i32
  }
  func.func @transform_3(%arg0: i32) -> (i32, i32, i32) {
    %c0_i32 = arith.constant 0 : i32
    %c0_i32_0 = arith.constant 0 : i32
    %c0_i32_1 = arith.constant 0 : i32
    %c0_i32_2 = arith.constant 0 : i32
    return %c0_i32, %c0_i32_0, %c0_i32_1 : i32, i32, i32
  }
  func.func @transform_4(%arg0: i32) -> (i32, i32) {
    %c0_i32 = arith.constant 0 : i32
    %c0_i32_0 = arith.constant 0 : i32
    %c0_i32_1 = arith.constant 0 : i32
    return %c0_i32, %c0_i32_0 : i32, i32
  }
  func.func @transform_5(%arg0: i32) -> (i32, i32, i32) {
    %c0_i32 = arith.constant 0 : i32
    %c0_i32_0 = arith.constant 0 : i32
    %c0_i32_1 = arith.constant 0 : i32
    return %arg0, %c0_i32, %c0_i32_0 : i32, i32, i32
  }
}

</mosaic_0001>

<llo_original>
// kernel: tpu_custom_call.1
$region0: #{tpu_custom_call.1}
  #allocation0 [shape = 'u32[]', space=smem, size = 0x4, offset = 0x4, fixed_abs, tag = 'smem constant byte address 0x4 - core index']
  #allocation1 [shape = 'u32[72,128]{1,0:T(1,128)}', space=vmem, size = 0x9000, scoped, tag = 'internal scratch']
  #allocation2 [shape = 'f32[2,18,72]{2,1,0:T(8,128)}', space=vmem, size = 0x6000, scoped, tag = 'scratch operand']
  %s0 = inlined_call_operand.vmem [shape: f32[2,18,72], index: 0, kind: input, shape index: {}]
  %s1 = inlined_call_operand.vmem [shape: f32[3,72,64], index: 1, kind: input, shape index: {}]
  %s2 = inlined_call_operand.vmem [shape: f32[1,64], index: 2, kind: input, shape index: {}]
  %s3 = inlined_call_operand.vmem [shape: f32[3,72,64], index: 3, kind: input, shape index: {}]
  %s4 = inlined_call_operand.vmem [shape: f32[1,64], index: 4, kind: input, shape index: {}]
  %s5 = inlined_call_operand.hbm [shape: f32[2,16,64], index: 5, kind: output, shape index: {}]
  %s6 = sld [smem:[#allocation0]]
  $region30: #{tpu_custom_call.1} parent=0
    _
  %s8 = ssub.s32 1, %s6
  %s9 = scalar_select 0, %s8, %s6
  $region1: #{tpu_custom_call.1} parent=0
    #allocation3 [shape = 'u8[16384]{0}', space=vmem, size = 0x4000, scoped, tag = 'output window, operand 0, single buffered']
    #allocation4 [shape = 's32[1]{0}', space=sflag, size = 0x4, scoped, tag = 'scoped memory for tpu_custom_call.1']
    %10 = vsyncpa [#allocation4], 0
    // Predicated region
    $region2: #{tpu_custom_call.1} parent=1 // pred_check
      _
    $region3: #{tpu_custom_call.1} parent=1 // pred_check_branch
      %12 = sbr.rel (0) target = $region5
    $region4: #{tpu_custom_call.1} parent=1 // pred_region
      _
    $region5: #{tpu_custom_call.1} parent=1 // pred_fallthru
      _
    // Predicated region
    $region6: #{tpu_custom_call.1} parent=1 // pred_check
      _
    $region7: #{tpu_custom_call.1} parent=1 // pred_check_branch
      %14 = sbr.rel (0) target = $region9
    $region8: #{tpu_custom_call.1} parent=1 // pred_region
      _
    $region9: #{tpu_custom_call.1} parent=1 // pred_fallthru
      _
    // Predicated region
    $region10: #{tpu_custom_call.1} parent=1 // pred_check
      _
    $region11: #{tpu_custom_call.1} parent=1 // pred_check_branch
      %16 = sbr.rel (0) target = $region13
    $region12: #{tpu_custom_call.1} parent=1 // pred_region
      _
    $region13: #{tpu_custom_call.1} parent=1 // pred_fallthru
      _
    // Predicated region
    $region14: #{tpu_custom_call.1} parent=1 // pred_check
      _
    $region15: #{tpu_custom_call.1} parent=1 // pred_check_branch
      %18 = sbr.rel (0) target = $region17
    $region16: #{tpu_custom_call.1} parent=1 // pred_region
      _
    $region17: #{tpu_custom_call.1} parent=1 // pred_fallthru
      _
    // Predicated region
    $region18: #{tpu_custom_call.1} parent=1 // pred_check
      _
    $region19: #{tpu_custom_call.1} parent=1 // pred_check_branch
      %20 = sbr.rel (0) target = $region21
    $region20: #{tpu_custom_call.1} parent=1 // pred_region
      _
    $region21: #{tpu_custom_call.1} parent=1 // pred_fallthru
      _
    %v21 = vld [vmem:[%s0] sm:$0xff]
    %v22 = vld [vmem:[%s0 + $0x8] sm:$0xff]
    %v23 = vld [vmem:[%s0 + $0x10] sm:$0x3]
    %v24 = vld [vmem:[%s0 + $0x18] sm:$0xff]
    %v25 = vld [vmem:[%s0 + $0x20] sm:$0xff]
    %v26 = vld [vmem:[%s0 + $0x28] sm:$0x3]
    %v27 = vmax.f32 %v21, 0.0
    %v28 = vmax.f32 %v22, 0.0
    %v29 = vmax.f32 %v23, 0.0
    %v30 = vmax.f32 %v24, 0.0
    %v31 = vmax.f32 %v25, 0.0
    %v32 = vmax.f32 %v26, 0.0
    %v33 = vld [vmem:[%s1] sm:$0xff]
    %v34 = vld [vmem:[%s1 + $0x8] sm:$0xff]
    %v35 = vld [vmem:[%s1 + $0x10] sm:$0xff]
    %v36 = vld [vmem:[%s1 + $0x18] sm:$0xff]
    %v37 = vld [vmem:[%s1 + $0x20] sm:$0xff]
    %v38 = vld [vmem:[%s1 + $0x28] sm:$0xff]
    %v39 = vld [vmem:[%s1 + $0x30] sm:$0xff]
    %v40 = vld [vmem:[%s1 + $0x38] sm:$0xff]
    %v41 = vld [vmem:[%s1 + $0x40] sm:$0xff]
    %vm48 = vcmask 1046528
    %v49 = vrot.slane %v27, 1
    %v50 = vrot.slane %v28, 1
    %v51 = vsel %vm48, %v49, %v50
    %v52 = vrot.slane %v29, 1
    %v53 = vsel %vm48, %v50, %v52
    %v54 = vrot.slane %v30, 1
    %v55 = vrot.slane %v31, 1
    %v56 = vsel %vm48, %v54, %v55
    %v57 = vrot.slane %v32, 1
    %v58 = vsel %vm48, %v55, %v57
    %s59 = scalar_lea.vmem %s1, 72
    %v60 = vld [vmem:[%s59] sm:$0xff]
    %v61 = vld [vmem:[%s59 + $0x8] sm:$0xff]
    %v62 = vld [vmem:[%s59 + $0x10] sm:$0xff]
    %v63 = vld [vmem:[%s59 + $0x18] sm:$0xff]
    %v64 = vld [vmem:[%s59 + $0x20] sm:$0xff]
    %v65 = vld [vmem:[%s59 + $0x28] sm:$0xff]
    %v66 = vld [vmem:[%s59 + $0x30] sm:$0xff]
    %v67 = vld [vmem:[%s59 + $0x38] sm:$0xff]
    %v68 = vld [vmem:[%s59 + $0x40] sm:$0xff]
    %vm69 = vcmask 588800
    %v70 = vsel %vm69, %v51, 0
    %v72 = vsel %vm69, %v53, 0
    %v74 = vsel %vm69, %v56, 0
    %v76 = vsel %vm69, %v58, 0
    %78 = vmatpush.msra.mxu0 0.0
    %79 = vmatpush.msra.mxu0 0.0
    %80 = vmatpush.msra.mxu0 0.0
    %81 = vmatpush.msra.mxu0 0.0
    %82 = vmatpush.msra.mxu0 0.0
    %83 = vmatpush.msra.mxu0 0.0
    %84 = vmatpush.msra.mxu0 0.0
    %85 = vmatpush.msra.mxu0 %v68
    %86 = vmatpush.msra.mxu0 %v67
    %87 = vmatpush.msra.mxu0 %v66
    %88 = vmatpush.msra.mxu0 %v65
    %89 = vmatpush.msra.mxu0 %v64
    %90 = vmatpush.msra.mxu0 %v63
    %91 = vmatpush.msra.mxu0 %v62
    %92 = vmatpush.msra.mxu0 %v61
    %93 = vmatpush.msra.mxu0 %v60
    %94 = vmatmul.f32.gmra.mxu0 %v70
    %v95 = vpop.f32.mrf.mxu0
    %v96 = vadd.f32 0.0, %v95
    %97 = vmatmul.f32.gmra.mxu0 %v72
    %v98 = vpop.f32.mrf.mxu0
    %v99 = vadd.f32 0.0, %v98
    %100 = vmatmul.f32.gmra.mxu0 %v74
    %v101 = vpop.f32.mrf.mxu0
    %v102 = vadd.f32 0.0, %v101
    %103 = vmatmul.f32.gmra.mxu0 %v76
    %v104 = vpop.f32.mrf.mxu0
    %v105 = vadd.f32 0.0, %v104
    %106 = vdwg.mxu0
    %v107 = vsel %vm69, %v27, 0
    %v109 = vsel %vm69, %v28, 0
    %v111 = vsel %vm69, %v30, 0
    %v113 = vsel %vm69, %v31, 0
    %115 = vmatpush.msra.mxu0 0.0
    %116 = vmatpush.msra.mxu0 0.0
    %117 = vmatpush.msra.mxu0 0.0
    %118 = vmatpush.msra.mxu0 0.0
    %119 = vmatpush.msra.mxu0 0.0
    %120 = vmatpush.msra.mxu0 0.0
    %121 = vmatpush.msra.mxu0 0.0
    %122 = vmatpush.msra.mxu0 %v41
    %123 = vmatpush.msra.mxu0 %v40
    %124 = vmatpush.msra.mxu0 %v39
    %125 = vmatpush.msra.mxu0 %v38
    %126 = vmatpush.msra.mxu0 %v37
    %127 = vmatpush.msra.mxu0 %v36
    %128 = vmatpush.msra.mxu0 %v35
    %129 = vmatpush.msra.mxu0 %v34
    %130 = vmatpush.msra.mxu0 %v33
    %131 = vmatmul.f32.gmra.mxu0 %v107
    %v132 = vpop.f32.mrf.mxu0
    %v133 = vadd.f32 %v96, %v132
    %134 = vmatmul.f32.gmra.mxu0 %v109
    %v135 = vpop.f32.mrf.mxu0
    %v136 = vadd.f32 %v99, %v135
    %137 = vmatmul.f32.gmra.mxu0 %v111
    %v138 = vpop.f32.mrf.mxu0
    %v139 = vadd.f32 %v102, %v138
    %140 = vmatmul.f32.gmra.mxu0 %v113
    %v141 = vpop.f32.mrf.mxu0
    %v142 = vadd.f32 %v105, %v141
    %143 = vdwg.mxu0
    %vm144 = vcmask 1045504
    %v145 = vrot.slane %v27, 2
    %v146 = vrot.slane %v28, 2
    %v147 = vsel %vm144, %v145, %v146
    %v148 = vrot.slane %v29, 2
    %v149 = vsel %vm144, %v146, %v148
    %v150 = vrot.slane %v30, 2
    %v151 = vrot.slane %v31, 2
    %v152 = vsel %vm144, %v150, %v151
    %v153 = vrot.slane %v32, 2
    %v154 = vsel %vm144, %v151, %v153
    %s155 = scalar_lea.vmem %s1, 144
    %v156 = vld [vmem:[%s155] sm:$0xff]
    %v157 = vld [vmem:[%s155 + $0x8] sm:$0xff]
    %v158 = vld [vmem:[%s155 + $0x10] sm:$0xff]
    %v159 = vld [vmem:[%s155 + $0x18] sm:$0xff]
    %v160 = vld [vmem:[%s155 + $0x20] sm:$0xff]
    %v161 = vld [vmem:[%s155 + $0x28] sm:$0xff]
    %v162 = vld [vmem:[%s155 + $0x30] sm:$0xff]
    %v163 = vld [vmem:[%s155 + $0x38] sm:$0xff]
    %v164 = vld [vmem:[%s155 + $0x40] sm:$0xff]
    %v165 = vsel %vm69, %v147, 0
    %v167 = vsel %vm69, %v149, 0
    %v169 = vsel %vm69, %v152, 0
    %v171 = vsel %vm69, %v154, 0
    %173 = vmatpush.msra.mxu0 0.0
    %174 = vmatpush.msra.mxu0 0.0
    %175 = vmatpush.msra.mxu0 0.0
    %176 = vmatpush.msra.mxu0 0.0
    %177 = vmatpush.msra.mxu0 0.0
    %178 = vmatpush.msra.mxu0 0.0
    %179 = vmatpush.msra.mxu0 0.0
    %180 = vmatpush.msra.mxu0 %v164
    %181 = vmatpush.msra.mxu0 %v163
    %182 = vmatpush.msra.mxu0 %v162
    %183 = vmatpush.msra.mxu0 %v161
    %184 = vmatpush.msra.mxu0 %v160
    %185 = vmatpush.msra.mxu0 %v159
    %186 = vmatpush.msra.mxu0 %v158
    %187 = vmatpush.msra.mxu0 %v157
    %188 = vmatpush.msra.mxu0 %v156
    %189 = vmatmul.f32.gmra.mxu0 %v165
    %v190 = vpop.f32.mrf.mxu0
    %v191 = vadd.f32 0.0, %v190
    %192 = vmatmul.f32.gmra.mxu0 %v167
    %v193 = vpop.f32.mrf.mxu0
    %v194 = vadd.f32 0.0, %v193
    %195 = vmatmul.f32.gmra.mxu0 %v169
    %v196 = vpop.f32.mrf.mxu0
    %v197 = vadd.f32 0.0, %v196
    %198 = vmatmul.f32.gmra.mxu0 %v171
    %v199 = vpop.f32.mrf.mxu0
    %v200 = vadd.f32 0.0, %v199
    %201 = vdwg.mxu0
    %v202 = vadd.f32 %v133, %v191
    %v203 = vadd.f32 %v136, %v194
    %v204 = vadd.f32 %v139, %v197
    %v205 = vadd.f32 %v142, %v200
    %v206 = vld [vmem:[%s2] sm:$0x1]
    %v208 = vperm.slane %v206, 0
    %v210 = vadd.f32 %v202, %v208
    %v211 = vadd.f32 %v203, %v208
    %v212 = vadd.f32 %v204, %v208
    %v213 = vadd.f32 %v205, %v208
    %vm214 = vcmask 581632
    %215 = vst.msk [vmem:[#allocation2] sm:$0x1] %vm214, 0.0
    %216 = vst.msk [vmem:[#allocation2 + $0x18] sm:$0x1] %vm214, 0.0
    %217 = vst.msk [vmem:[#allocation2 + $0x11] sm:$0x1] %vm214, 0.0
    %218 = vst.msk [vmem:[#allocation2 + $0x29] sm:$0x1] %vm214, 0.0
    %vm219 = vcmask 31744
    %220 = vst.msk [vmem:[#allocation2] sm:$0xff] %vm219, 0.0
    %221 = vst.msk [vmem:[#allocation2 + $0x8] sm:$0xff] %vm219, 0.0
    %vm222 = vcmask 25600
    %223 = vst.msk [vmem:[#allocation2 + $0x10] sm:$0x3] %vm222, 0.0
    %224 = vst.msk [vmem:[#allocation2 + $0x18] sm:$0xff] %vm219, 0.0
    %225 = vst.msk [vmem:[#allocation2 + $0x20] sm:$0xff] %vm219, 0.0
    %226 = vst.msk [vmem:[#allocation2 + $0x28] sm:$0x3] %vm222, 0.0
    %vm227 = vcmask 589344
    %228 = vst.msk [vmem:[#allocation2] sm:$0xff] %vm227, 0.0
    %229 = vst.msk [vmem:[#allocation2 + $0x8] sm:$0xff] %vm227, 0.0
    %vm230 = vcmask 583200
    %231 = vst.msk [vmem:[#allocation2 + $0x10] sm:$0x3] %vm230, 0.0
    %232 = vst.msk [vmem:[#allocation2 + $0x18] sm:$0xff] %vm227, 0.0
    %233 = vst.msk [vmem:[#allocation2 + $0x20] sm:$0xff] %vm227, 0.0
    %234 = vst.msk [vmem:[#allocation2 + $0x28] sm:$0x3] %vm230, 0.0
    %v235 = vmax.f32 %v210, 0.0
    %v236 = vmax.f32 %v211, 0.0
    %v237 = vmax.f32 %v212, 0.0
    %v238 = vmax.f32 %v213, 0.0
    %243 = vrot.lane.b32.xlu0 %v235, 4
    %v244 = vpop.permute.xlu0 %243
    %245 = vrot.lane.b32.xlu0 %v236, 4
    %v246 = vpop.permute.xlu0 %245
    %247 = vrot.lane.b32.xlu0 %v237, 4
    %v248 = vpop.permute.xlu0 %247
    %249 = vrot.lane.b32.xlu0 %v238, 4
    %v250 = vpop.permute.xlu0 %249
    %vm255 = vcmask 556064
    %256 = vst.msk [vmem:[#allocation2 + $0x1] sm:$0xff] %vm255, %v244
    %257 = vst.msk [vmem:[#allocation2 + $0x9] sm:$0xff] %vm255, %v246
    %258 = vst.msk [vmem:[#allocation2 + $0x19] sm:$0xff] %vm255, %v248
    %259 = vst.msk [vmem:[#allocation2 + $0x21] sm:$0xff] %vm255, %v250
    %v260 = vld [vmem:[#allocation2] sm:$0xff]
    %v261 = vld [vmem:[#allocation2 + $0x8] sm:$0xff]
    %v262 = vld [vmem:[#allocation2 + $0x10] sm:$0x3]
    %v263 = vld [vmem:[#allocation2 + $0x18] sm:$0xff]
    %v264 = vld [vmem:[#allocation2 + $0x20] sm:$0xff]
    %v265 = vld [vmem:[#allocation2 + $0x28] sm:$0x3]
    %v266 = vld [vmem:[%s3] sm:$0xff]
    %v267 = vld [vmem:[%s3 + $0x8] sm:$0xff]
    %v268 = vld [vmem:[%s3 + $0x10] sm:$0xff]
    %v269 = vld [vmem:[%s3 + $0x18] sm:$0xff]
    %v270 = vld [vmem:[%s3 + $0x20] sm:$0xff]
    %v271 = vld [vmem:[%s3 + $0x28] sm:$0xff]
    %v272 = vld [vmem:[%s3 + $0x30] sm:$0xff]
    %v273 = vld [vmem:[%s3 + $0x38] sm:$0xff]
    %v274 = vld [vmem:[%s3 + $0x40] sm:$0xff]
    %v281 = vrot.slane %v260, 1
    %v282 = vrot.slane %v261, 1
    %v283 = vsel %vm48, %v281, %v282
    %v284 = vrot.slane %v262, 1
    %v285 = vsel %vm48, %v282, %v284
    %v286 = vrot.slane %v263, 1
    %v287 = vrot.slane %v264, 1
    %v288 = vsel %vm48, %v286, %v287
    %v289 = vrot.slane %v265, 1
    %v290 = vsel %vm48, %v287, %v289
    %s291 = scalar_lea.vmem %s3, 72
    %v292 = vld [vmem:[%s291] sm:$0xff]
    %v293 = vld [vmem:[%s291 + $0x8] sm:$0xff]
    %v294 = vld [vmem:[%s291 + $0x10] sm:$0xff]
    %v295 = vld [vmem:[%s291 + $0x18] sm:$0xff]
    %v296 = vld [vmem:[%s291 + $0x20] sm:$0xff]
    %v297 = vld [vmem:[%s291 + $0x28] sm:$0xff]
    %v298 = vld [vmem:[%s291 + $0x30] sm:$0xff]
    %v299 = vld [vmem:[%s291 + $0x38] sm:$0xff]
    %v300 = vld [vmem:[%s291 + $0x40] sm:$0xff]
    %v301 = vsel %vm69, %v283, 0
    %v303 = vsel %vm69, %v285, 0
    %v305 = vsel %vm69, %v288, 0
    %v307 = vsel %vm69, %v290, 0
    %309 = vmatpush.msra.mxu0 0.0
    %310 = vmatpush.msra.mxu0 0.0
    %311 = vmatpush.msra.mxu0 0.0
    %312 = vmatpush.msra.mxu0 0.0
    %313 = vmatpush.msra.mxu0 0.0
    %314 = vmatpush.msra.mxu0 0.0
    %315 = vmatpush.msra.mxu0 0.0
    %316 = vmatpush.msra.mxu0 %v300
    %317 = vmatpush.msra.mxu0 %v299
    %318 = vmatpush.msra.mxu0 %v298
    %319 = vmatpush.msra.mxu0 %v297
    %320 = vmatpush.msra.mxu0 %v296
    %321 = vmatpush.msra.mxu0 %v295
    %322 = vmatpush.msra.mxu0 %v294
    %323 = vmatpush.msra.mxu0 %v293
    %324 = vmatpush.msra.mxu0 %v292
    %325 = vmatmul.f32.gmra.mxu0 %v301
    %v326 = vpop.f32.mrf.mxu0
    %v327 = vadd.f32 0.0, %v326
    %328 = vmatmul.f32.gmra.mxu0 %v303
    %v329 = vpop.f32.mrf.mxu0
    %v330 = vadd.f32 0.0, %v329
    %331 = vmatmul.f32.gmra.mxu0 %v305
    %v332 = vpop.f32.mrf.mxu0
    %v333 = vadd.f32 0.0, %v332
    %334 = vmatmul.f32.gmra.mxu0 %v307
    %v335 = vpop.f32.mrf.mxu0
    %v336 = vadd.f32 0.0, %v335
    %337 = vdwg.mxu0
    %v338 = vsel %vm69, %v260, 0
    %v340 = vsel %vm69, %v261, 0
    %v342 = vsel %vm69, %v263, 0
    %v344 = vsel %vm69, %v264, 0
    %346 = vmatpush.msra.mxu0 0.0
    %347 = vmatpush.msra.mxu0 0.0
    %348 = vmatpush.msra.mxu0 0.0
    %349 = vmatpush.msra.mxu0 0.0
    %350 = vmatpush.msra.mxu0 0.0
    %351 = vmatpush.msra.mxu0 0.0
    %352 = vmatpush.msra.mxu0 0.0
    %353 = vmatpush.msra.mxu0 %v274
    %354 = vmatpush.msra.mxu0 %v273
    %355 = vmatpush.msra.mxu0 %v272
    %356 = vmatpush.msra.mxu0 %v271
    %357 = vmatpush.msra.mxu0 %v270
    %358 = vmatpush.msra.mxu0 %v269
    %359 = vmatpush.msra.mxu0 %v268
    %360 = vmatpush.msra.mxu0 %v267
    %361 = vmatpush.msra.mxu0 %v266
    %362 = vmatmul.f32.gmra.mxu0 %v338
    %v363 = vpop.f32.mrf.mxu0
    %v364 = vadd.f32 %v327, %v363
    %365 = vmatmul.f32.gmra.mxu0 %v340
    %v366 = vpop.f32.mrf.mxu0
    %v367 = vadd.f32 %v330, %v366
    %368 = vmatmul.f32.gmra.mxu0 %v342
    %v369 = vpop.f32.mrf.mxu0
    %v370 = vadd.f32 %v333, %v369
    %371 = vmatmul.f32.gmra.mxu0 %v344
    %v372 = vpop.f32.mrf.mxu0
    %v373 = vadd.f32 %v336, %v372
    %374 = vdwg.mxu0
    %v375 = vrot.slane %v260, 2
    %v376 = vrot.slane %v261, 2
    %v377 = vsel %vm144, %v375, %v376
    %v378 = vrot.slane %v262, 2
    %v379 = vsel %vm144, %v376, %v378
    %v380 = vrot.slane %v263, 2
    %v381 = vrot.slane %v264, 2
    %v382 = vsel %vm144, %v380, %v381
    %v383 = vrot.slane %v265, 2
    %v384 = vsel %vm144, %v381, %v383
    %s385 = scalar_lea.vmem %s3, 144
    %v386 = vld [vmem:[%s385] sm:$0xff]
    %v387 = vld [vmem:[%s385 + $0x8] sm:$0xff]
    %v388 = vld [vmem:[%s385 + $0x10] sm:$0xff]
    %v389 = vld [vmem:[%s385 + $0x18] sm:$0xff]
    %v390 = vld [vmem:[%s385 + $0x20] sm:$0xff]
    %v391 = vld [vmem:[%s385 + $0x28] sm:$0xff]
    %v392 = vld [vmem:[%s385 + $0x30] sm:$0xff]
    %v393 = vld [vmem:[%s385 + $0x38] sm:$0xff]
    %v394 = vld [vmem:[%s385 + $0x40] sm:$0xff]
    %v395 = vsel %vm69, %v377, 0
    %v397 = vsel %vm69, %v379, 0
    %v399 = vsel %vm69, %v382, 0
    %v401 = vsel %vm69, %v384, 0
    %403 = vmatpush.msra.mxu0 0.0
    %404 = vmatpush.msra.mxu0 0.0
    %405 = vmatpush.msra.mxu0 0.0
    %406 = vmatpush.msra.mxu0 0.0
    %407 = vmatpush.msra.mxu0 0.0
    %408 = vmatpush.msra.mxu0 0.0
    %409 = vmatpush.msra.mxu0 0.0
    %410 = vmatpush.msra.mxu0 %v394
    %411 = vmatpush.msra.mxu0 %v393
    %412 = vmatpush.msra.mxu0 %v392
    %413 = vmatpush.msra.mxu0 %v391
    %414 = vmatpush.msra.mxu0 %v390
    %415 = vmatpush.msra.mxu0 %v389
    %416 = vmatpush.msra.mxu0 %v388
    %417 = vmatpush.msra.mxu0 %v387
    %418 = vmatpush.msra.mxu0 %v386
    %419 = vmatmul.f32.gmra.mxu0 %v395
    %v420 = vpop.f32.mrf.mxu0
    %v421 = vadd.f32 0.0, %v420
    %422 = vmatmul.f32.gmra.mxu0 %v397
    %v423 = vpop.f32.mrf.mxu0
    %v424 = vadd.f32 0.0, %v423
    %425 = vmatmul.f32.gmra.mxu0 %v399
    %v426 = vpop.f32.mrf.mxu0
    %v427 = vadd.f32 0.0, %v426
    %428 = vmatmul.f32.gmra.mxu0 %v401
    %v429 = vpop.f32.mrf.mxu0
    %v430 = vadd.f32 0.0, %v429
    %431 = vdwg.mxu0
    %v432 = vadd.f32 %v364, %v421
    %v433 = vadd.f32 %v367, %v424
    %v434 = vadd.f32 %v370, %v427
    %v435 = vadd.f32 %v373, %v430
    %v436 = vld [vmem:[%s4] sm:$0x1]
    %v438 = vperm.slane %v436, 0
    %v440 = vadd.f32 %v432, %v438
    %v441 = vadd.f32 %v433, %v438
    %v442 = vadd.f32 %v434, %v438
    %v443 = vadd.f32 %v435, %v438
    %v444 = vld [vmem:[%s0 + $0x1] sm:$0xff]
    %v445 = vld [vmem:[%s0 + $0x9] sm:$0xff]
    %v446 = vld [vmem:[%s0 + $0x19] sm:$0xff]
    %v447 = vld [vmem:[%s0 + $0x21] sm:$0xff]
    %452 = vrot.lane.b32.xlu0 %v440, 4
    %v453 = vpop.permute.xlu0 %452
    %454 = vrot.lane.b32.xlu0 %v441, 4
    %v455 = vpop.permute.xlu0 %454
    %456 = vrot.lane.b32.xlu0 %v442, 4
    %v457 = vpop.permute.xlu0 %456
    %458 = vrot.lane.b32.xlu0 %v443, 4
    %v459 = vpop.permute.xlu0 %458
    %v464 = vadd.f32 %v444, %v453
    %v465 = vadd.f32 %v445, %v455
    %v466 = vadd.f32 %v446, %v457
    %v467 = vadd.f32 %v447, %v459
    %472 = vrot.lane.b32.xlu0 %v464, 124
    %v473 = vpop.permute.xlu0 %472
    %474 = vrot.lane.b32.xlu0 %v465, 124
    %v475 = vpop.permute.xlu0 %474
    %476 = vrot.lane.b32.xlu0 %v466, 124
    %v477 = vpop.permute.xlu0 %476
    %478 = vrot.lane.b32.xlu0 %v467, 124
    %v479 = vpop.permute.xlu0 %478
    %vm484 = vcmask 523264
    %485 = vst.msk [vmem:[#allocation3] sm:$0xff] %vm484, %v473
    %486 = vst.msk [vmem:[#allocation3 + $0x8] sm:$0xff] %vm484, %v475
    %487 = vst.msk [vmem:[#allocation3 + $0x10] sm:$0xff] %vm484, %v477
    %488 = vst.msk [vmem:[#allocation3 + $0x18] sm:$0xff] %vm484, %v479
    // Predicated region
    $region22: #{tpu_custom_call.1} parent=1 // pred_check
      _
    $region23: #{tpu_custom_call.1} parent=1 // pred_check_branch
      %490 = sbr.rel (0) target = $region25
    $region24: #{tpu_custom_call.1} parent=1 // pred_region
      %492 = vsyncadd [#allocation4], 0
      %s493 = sshll.u32 [#allocation3], 4
      %s494 = int_to_ptr.vmem [resolvable:$true] %s493
      %s495 = sshll.u32 %s5, 4
      %s496 = int_to_ptr.hbm [resolvable:$true] %s495
      %501 = dma.vmem_to_hbm [thread:$0]  %s494, 512, %s496, [#allocation4], 128, 128, 8
    $region25: #{tpu_custom_call.1} parent=1 // pred_fallthru
      _
    // Predicated region
    $region26: #{tpu_custom_call.1} parent=1 // pred_check
      _
    $region27: #{tpu_custom_call.1} parent=1 // pred_check_branch
      %503 = sbr.rel (0) target = $region29
    $region28: #{tpu_custom_call.1} parent=1 // pred_region
      %505 = dma.done [#allocation4], 512
    $region29: #{tpu_custom_call.1} parent=1 // pred_fallthru
      _
    %506 = vsyncpa [#allocation4], 1

</llo_original>
